<compile_context>
chip_gen: v5e
topology: v5e:2x2
jax: 0.10.0
libtpu: 0.0.40
codegen_flags: <defaults>
</compile_context>

<pallas_src>
import functools

import jax
import jax.numpy as jnp
from jax.experimental import pallas as pl
from jax.experimental.pallas import tpu as pltpu

HIDDEN_1 = 10
HIDDEN_2 = 10
SUBLANE = 8


def _round_up(n, m):
    return -(-n // m) * m


def _object_model_kernel(num_objects, V, H1, H2, out_dim, offs,
                         x_ref, slab_ref, out_ref):
    """x_ref: (B*N, 3) int32; slab_ref: (R, W) f32 packed params; out_ref: (B, out_dim) f32."""
    BN = x_ref.shape[0]
    B = BN // num_objects
    o_m, o_b1, o_wt, o_bt, o_w2, o_b2, o_w3, o_b3 = offs

    x = x_ref[...]                                   # single (BN, 3) int32 load
    idx = x[:, 0:1]                                  # (BN, 1) vocab indices (lane slice)
    pos = x[:, 1:3].astype(jnp.float32)              # (BN, 2) positions

    # Embedding + fc1 fused: feat = [one_hot | pos]  (BN, V+2),  M = [embed @ W1_emb ; W1_pos].
    one_hot = (jax.lax.broadcasted_iota(jnp.int32, (BN, V), 1) == idx).astype(jnp.float32)
    feat = jnp.concatenate([one_hot, pos], axis=1)   # (BN, V+2) — lane concat, <=128 lanes

    # Static, 8-row-aligned slices of the packed parameter slab.
    m  = slab_ref[o_m:o_m + V + 2, 0:H1]
    b1 = slab_ref[o_b1:o_b1 + 1, 0:H1]
    wt = slab_ref[o_wt:o_wt + H1, 0:H2]
    bt = slab_ref[o_bt:o_bt + 1, 0:H2]
    w2 = slab_ref[o_w2:o_w2 + H1, 0:H2]
    b2 = slab_ref[o_b2:o_b2 + 1, 0:H2]
    w3 = slab_ref[o_w3:o_w3 + H2, 0:out_dim]
    b3 = slab_ref[o_b3:o_b3 + 1, 0:out_dim]

    # fc1 (fused with embedding) + relu, fc_temp + relu — single MXU matmul each.
    h1 = jnp.maximum(jnp.dot(feat, m, preferred_element_type=jnp.float32) + b1, 0.0)
    ht = jnp.maximum(jnp.dot(h1, wt, preferred_element_type=jnp.float32) + bt, 0.0)

    # Max over the object dimension.  N == 8 keeps every per-scene slice aligned to a
    # sublane group, so each max is a pure sublane reduction; B is small & static.
    pooled = jnp.concatenate(
        [jnp.max(ht[b * num_objects:(b + 1) * num_objects, :], axis=0, keepdims=True)
         for b in range(B)],
        axis=0)                                      # (B, H1)

    # fc2 + relu, then fc3.
    h2 = jnp.maximum(jnp.dot(pooled, w2, preferred_element_type=jnp.float32) + b2, 0.0)
    out_ref[...] = (jnp.dot(h2, w3, preferred_element_type=jnp.float32)
                    + b3).astype(out_ref.dtype)


def pack_params(params):
    """Fold the embedding into fc1 and pack all parameters into one f32 slab (one-time cost).

    Returns (slab, meta): slab is (R, W) f32 with every section starting on an
    8-row (sublane) boundary; meta carries the static sizes/offsets for the kernel.
    """
    embed = params["embed"]                  # (V, E), row 0 zeroed (padding_idx=0)
    w1, b1 = params["w1"], params["b1"]      # (E+2, H1), (1, H1)
    wt, bt = params["wt"], params["bt"]
    w2, b2 = params["w2"], params["b2"]
    w3, b3 = params["w3"], params["b3"]      # (H2, out_dim), (1, out_dim)

    V, E = embed.shape
    H1 = w1.shape[1]
    H2 = w2.shape[1]
    out_dim = w3.shape[1]
    W = max(H1, H2, out_dim)

    # fc1(concat(emb, pos)) == concat(one_hot, pos) @ concat([embed @ W1_emb, W1_pos], 0)
    m = jnp.concatenate(
        [jnp.dot(embed, w1[:E], precision=jax.lax.Precision.HIGHEST), w1[E:]], axis=0)

    sections = [m, b1, wt, bt, w2, b2, w3, b3]

    def pad(a):
        r, c = a.shape
        return jnp.pad(a, ((0, _round_up(r, SUBLANE) - r), (0, W - c)))

    padded = [pad(s) for s in sections]
    offsets, off = [], 0
    for p in padded:
        offsets.append(off)
        off += p.shape[0]
    slab = jnp.concatenate(padded, axis=0).astype(jnp.float32)   # (R, W) f32
    meta = dict(V=V, H1=H1, H2=H2, out_dim=out_dim, offsets=tuple(offsets))
    return slab, meta


def make_forward(meta, num_objects):
    """Builds a jitted forward(x, slab) with all static metadata baked in.

    x: (B, num_objects, 3) int32, slab: packed f32 params.  Returns (B, out_dim) f32
    (or (out_dim,) for B == 1, mirroring torch's `.squeeze()` for B >= 1).
    """
    V, H1, H2, out_dim = meta["V"], meta["H1"], meta["H2"], meta["out_dim"]
    offs = meta["offsets"]
    kernel = functools.partial(_object_model_kernel, num_objects, V, H1, H2, out_dim, offs)
    vmem = pl.BlockSpec(memory_space=pltpu.MemorySpace.VMEM)

    @jax.jit
    def forward(x, slab):
        B, N, _ = x.shape
        assert N == num_objects
        x_flat = x.reshape(B * N, 3).astype(jnp.int32)

        flops = 2 * (B * N * (V + 2) * H1 + B * N * H1 * H2 + B * H1 * H2 + B * H2 * out_dim)
        bytes_accessed = x_flat.size * 4 + slab.size * 4 + B * out_dim * 4

        # TODO(synk): if B*N or vocab scale up, add a 1-D "parallel" grid over scenes
        # (v7x has 2 TCs) and replace the one-hot matmul with a gathered lookup.
        out = pl.pallas_call(
            kernel,
            out_shape=jax.ShapeDtypeStruct((B, out_dim), jnp.float32),
            in_specs=[vmem, vmem],
            out_specs=vmem,
            cost_estimate=pl.CostEstimate(flops=flops, transcendentals=0,
                                          bytes_accessed=bytes_accessed),
        )(x_flat, slab)
        # torch does `.max(1)[0].squeeze()`: only changes the shape when B == 1.
        return out[0] if B == 1 else out

    return forward


def init_params(key, vocab_size, embed_dim, out_dim):
    """Deterministic synthetic parameters matching the nn.Module shapes."""
    ks = jax.random.split(key, 9)

    def linear(kw, kb, fan_in, fan_out):
        bound = 1.0 / jnp.sqrt(jnp.float32(fan_in))
        w = jax.random.uniform(kw, (fan_in, fan_out), jnp.float32, -bound, bound)
        b = jax.random.uniform(kb, (1, fan_out), jnp.float32, -bound, bound)
        return w, b

    embed = jax.random.normal(ks[0], (vocab_size, embed_dim), jnp.float32)
    embed = embed.at[0].set(0.0)  # nn.Embedding(padding_idx=0)

    w1, b1 = linear(ks[1], ks[2], embed_dim + 2, HIDDEN_1)   # fc1
    wt, bt = linear(ks[3], ks[4], HIDDEN_1, HIDDEN_2)        # fc_temp
    w2, b2 = linear(ks[5], ks[6], HIDDEN_1, HIDDEN_2)        # fc2
    w3, b3 = linear(ks[7], ks[8], HIDDEN_2, out_dim)         # fc3

    return dict(embed=embed, w1=w1, b1=b1, wt=wt, bt=bt, w2=w2, b2=b2, w3=w3, b3=b3)


def reference_forward(x, params):
    """Pure-JAX reference mirroring the PyTorch forward, for validation."""
    B, N, _ = x.shape
    idx = x[:, :, 0]
    emb = params["embed"][idx]                                  # (B, N, E)
    pos = x[:, :, 1:].astype(jnp.float32)                       # (B, N, 2)
    feat = jnp.concatenate([emb, pos], axis=2).reshape(B * N, -1)
    h1 = jax.nn.relu(feat @ params["w1"] + params["b1"])
    ht = jax.nn.relu(h1 @ params["wt"] + params["bt"])
    pooled = ht.reshape(B, N, -1).max(axis=1)
    h2 = jax.nn.relu(pooled @ params["w2"] + params["b2"])
    return h2 @ params["w3"] + params["b3"]


if __name__ == "__main__":
    # Small shapes consistent with the module: B=2 scenes, 8 objects each,
    # vocab_size=20, embed_dim=32, out_dim=4.
    B, NUM_OBJECTS, EMBED_DIM, VOCAB, OUT_DIM = 2, 8, 32, 20, 4

    root = jax.random.PRNGKey(0)
    k_params, k_idx, k_pos = jax.random.split(root, 3)

    params = init_params(k_params, VOCAB, EMBED_DIM, OUT_DIM)

    idx = jax.random.randint(k_idx, (B, NUM_OBJECTS, 1), 0, VOCAB, dtype=jnp.int32)
    pos = jax.random.randint(k_pos, (B, NUM_OBJECTS, 2), 0, 10, dtype=jnp.int32)
    x = jnp.concatenate([idx, pos], axis=-1)   # (B, num_objects, 3) int32

    # One-time packing (embedding fold + slab layout), then a jitted single-kernel forward.
    slab, meta = pack_params(params)
    forward = make_forward(meta, NUM_OBJECTS)

    out = jax.block_until_ready(forward(x, slab))
    ref = jax.block_until_ready(reference_forward(x, params))

    assert out.shape == (B, OUT_DIM), out.shape
    assert jnp.allclose(out, ref, atol=1e-4, rtol=1e-4), (out, ref)

    print("KERNEL_OK")
</pallas_src>

<mosaic_0001>
module attributes {stable_mosaic.version = 11 : i64} {
  func.func @_object_model_kernel(%arg0: memref<16x3xi32, #tpu.memory_space<vmem>>, %arg1: memref<104x10xf32, #tpu.memory_space<vmem>>, %arg2: memref<2x4xf32, #tpu.memory_space<vmem>>) attributes {dimension_semantics = [], scalar_prefetch = 0 : i64, scratch_operands = 0 : i64, tpu.core_type = #tpu.core_type<tc>} {
    %c0 = arith.constant 0 : index
    %c0_0 = arith.constant 0 : index
    %0 = vector.load %arg0[%c0, %c0_0] : memref<16x3xi32, #tpu.memory_space<vmem>>, vector<16x3xi32>
    %1 = vector.extract_strided_slice %0 {offsets = [0, 0], sizes = [16, 1], strides = [1, 1]} : vector<16x3xi32> to vector<16x1xi32>
    %2 = vector.extract_strided_slice %0 {offsets = [0, 1], sizes = [16, 2], strides = [1, 1]} : vector<16x3xi32> to vector<16x2xi32>
    %3 = arith.sitofp %2 : vector<16x2xi32> to vector<16x2xf32>
    %4 = tpu.iota {dimensions = array<i32: 1>} : vector<16x20xi32>
    %5 = vector.broadcast %1 : vector<16x1xi32> to vector<16x20xi32>
    %6 = arith.cmpi eq, %4, %5 : vector<16x20xi32>
    %7 = arith.extui %6 : vector<16x20xi1> to vector<16x20xi32>
    %8 = arith.sitofp %7 : vector<16x20xi32> to vector<16x20xf32>
    %9 = tpu.concatenate %8, %3 in 1 : vector<16x20xf32>, vector<16x2xf32> -> vector<16x22xf32>
    %c0_1 = arith.constant 0 : index
    %c0_2 = arith.constant 0 : index
    %10 = vector.load %arg1[%c0_1, %c0_2] : memref<104x10xf32, #tpu.memory_space<vmem>>, vector<22x10xf32>
    %c24 = arith.constant 24 : index
    %c0_3 = arith.constant 0 : index
    %11 = vector.load %arg1[%c24, %c0_3] : memref<104x10xf32, #tpu.memory_space<vmem>>, vector<1x10xf32>
    %c32 = arith.constant 32 : index
    %c0_4 = arith.constant 0 : index
    %12 = vector.load %arg1[%c32, %c0_4] : memref<104x10xf32, #tpu.memory_space<vmem>>, vector<10x10xf32>
    %c48 = arith.constant 48 : index
    %c0_5 = arith.constant 0 : index
    %13 = vector.load %arg1[%c48, %c0_5] : memref<104x10xf32, #tpu.memory_space<vmem>>, vector<1x10xf32>
    %c56 = arith.constant 56 : index
    %c0_6 = arith.constant 0 : index
    %14 = vector.load %arg1[%c56, %c0_6] : memref<104x10xf32, #tpu.memory_space<vmem>>, vector<10x10xf32>
    %c72 = arith.constant 72 : index
    %c0_7 = arith.constant 0 : index
    %15 = vector.load %arg1[%c72, %c0_7] : memref<104x10xf32, #tpu.memory_space<vmem>>, vector<1x10xf32>
    %c80 = arith.constant 80 : index
    %c0_8 = arith.constant 0 : index
    %16 = vector.load %arg1[%c80, %c0_8] : memref<104x10xf32, #tpu.memory_space<vmem>>, vector<10x4xf32>
    %c96 = arith.constant 96 : index
    %c0_9 = arith.constant 0 : index
    %17 = vector.load %arg1[%c96, %c0_9] : memref<104x10xf32, #tpu.memory_space<vmem>>, vector<1x4xf32>
    %cst = arith.constant dense<0.000000e+00> : vector<16x10xf32>
    %18 = tpu.matmul %9, %10, %cst {dimension_numbers = #tpu.dot_dimension_numbers<[1], [0], [0], [1], [0, 0, 1, 1], [], []>} : vector<16x22xf32>, vector<22x10xf32>, vector<16x10xf32> -> vector<16x10xf32>
    %19 = vector.broadcast %11 : vector<1x10xf32> to vector<16x10xf32>
    %20 = arith.addf %18, %19 : vector<16x10xf32>
    %cst_10 = arith.constant 0.000000e+00 : f32
    %21 = vector.broadcast %cst_10 : f32 to vector<16x10xf32>
    %22 = arith.maximumf %20, %21 : vector<16x10xf32>
    %cst_11 = arith.constant dense<0.000000e+00> : vector<16x10xf32>
    %23 = tpu.matmul %22, %12, %cst_11 {dimension_numbers = #tpu.dot_dimension_numbers<[1], [0], [0], [1], [0, 0, 1, 1], [], []>} : vector<16x10xf32>, vector<10x10xf32>, vector<16x10xf32> -> vector<16x10xf32>
    %24 = vector.broadcast %13 : vector<1x10xf32> to vector<16x10xf32>
    %25 = arith.addf %23, %24 : vector<16x10xf32>
    %cst_12 = arith.constant 0.000000e+00 : f32
    %26 = vector.broadcast %cst_12 : f32 to vector<16x10xf32>
    %27 = arith.maximumf %25, %26 : vector<16x10xf32>
    %28 = vector.extract_strided_slice %27 {offsets = [0, 0], sizes = [8, 10], strides = [1, 1]} : vector<16x10xf32> to vector<8x10xf32>
    %cst_13 = arith.constant dense<0xFF800000> : vector<10xf32>
    %29 = vector.multi_reduction <maximumf>, %28, %cst_13 [0] : vector<8x10xf32> to vector<10xf32>
    %30 = vector.shape_cast %29 : vector<10xf32> to vector<1x10xf32>
    %31 = vector.extract_strided_slice %27 {offsets = [8, 0], sizes = [8, 10], strides = [1, 1]} : vector<16x10xf32> to vector<8x10xf32>
    %cst_14 = arith.constant dense<0xFF800000> : vector<10xf32>
    %32 = vector.multi_reduction <maximumf>, %31, %cst_14 [0] : vector<8x10xf32> to vector<10xf32>
    %33 = vector.shape_cast %32 : vector<10xf32> to vector<1x10xf32>
    %34 = tpu.concatenate %30, %33 in 0 : vector<1x10xf32>, vector<1x10xf32> -> vector<2x10xf32>
    %cst_15 = arith.constant dense<0.000000e+00> : vector<2x10xf32>
    %35 = tpu.matmul %34, %14, %cst_15 {dimension_numbers = #tpu.dot_dimension_numbers<[1], [0], [0], [1], [0, 0, 1, 1], [], []>} : vector<2x10xf32>, vector<10x10xf32>, vector<2x10xf32> -> vector<2x10xf32>
    %36 = vector.broadcast %15 : vector<1x10xf32> to vector<2x10xf32>
    %37 = arith.addf %35, %36 : vector<2x10xf32>
    %cst_16 = arith.constant 0.000000e+00 : f32
    %38 = vector.broadcast %cst_16 : f32 to vector<2x10xf32>
    %39 = arith.maximumf %37, %38 : vector<2x10xf32>
    %cst_17 = arith.constant dense<0.000000e+00> : vector<2x4xf32>
    %40 = tpu.matmul %39, %16, %cst_17 {dimension_numbers = #tpu.dot_dimension_numbers<[1], [0], [0], [1], [0, 0, 1, 1], [], []>} : vector<2x10xf32>, vector<10x4xf32>, vector<2x4xf32> -> vector<2x4xf32>
    %41 = vector.broadcast %17 : vector<1x4xf32> to vector<2x4xf32>
    %42 = arith.addf %40, %41 : vector<2x4xf32>
    %c0_18 = arith.constant 0 : index
    %c0_19 = arith.constant 0 : index
    %43 = vector.load %arg2[%c0_18, %c0_19] : memref<2x4xf32, #tpu.memory_space<vmem>>, vector<2x4xf32>
    tpu.vector_store %arg2[%c0_18, %c0_19], %42 {strides = array<i32>} : memref<2x4xf32, #tpu.memory_space<vmem>>, vector<2x4xf32>,
    return
  }
}

</mosaic_0001>

<llo_original>
// kernel: forward.1
$region0: #{forward.1}
  #allocation0 [shape = 'u32[]', space=smem, size = 0x4, offset = 0x4, fixed_abs, tag = 'smem constant byte address 0x4 - core index']
  #allocation1 [shape = 'u32[72,128]{1,0:T(1,128)}', space=vmem, size = 0x9000, scoped, tag = 'internal scratch']
  %s0 = inlined_call_operand.vmem [shape: s32[16,3], index: 0, kind: input, shape index: {}]
  %s1 = inlined_call_operand.vmem [shape: f32[104,10], index: 1, kind: input, shape index: {}]
  %s2 = inlined_call_operand.hbm [shape: f32[2,4], index: 2, kind: output, shape index: {}]
  %s3 = sld [smem:[#allocation0]]
  $region18: #{forward.1} parent=0
    _
  %s5 = ssub.s32 1, %s3
  %s6 = scalar_select 0, %s5, %s3
  $region1: #{forward.1} parent=0
    #allocation2 [shape = 'u8[1024]{0}', space=vmem, size = 0x400, scoped, tag = 'output window, operand 0, single buffered']
    #allocation3 [shape = 's32[1]{0}', space=sflag, size = 0x4, scoped, tag = 'scoped memory for forward.1']
    %7 = vsyncpa [#allocation3], 0
    // Predicated region
    $region2: #{forward.1} parent=1 // pred_check
      _
    $region3: #{forward.1} parent=1 // pred_check_branch
      %9 = sbr.rel (0) target = $region5
    $region4: #{forward.1} parent=1 // pred_region
      _
    $region5: #{forward.1} parent=1 // pred_fallthru
      _
    // Predicated region
    $region6: #{forward.1} parent=1 // pred_check
      _
    $region7: #{forward.1} parent=1 // pred_check_branch
      %11 = sbr.rel (0) target = $region9
    $region8: #{forward.1} parent=1 // pred_region
      _
    $region9: #{forward.1} parent=1 // pred_fallthru
      _
    %v12 = vld [vmem:[%s0] sm:$0xff]
    %v13 = vld [vmem:[%s0 + $0x8] sm:$0xff]
    %v14 = vcvt.s32.f32 %v12
    %v15 = vcvt.s32.f32 %v13
    %v16 = vlaneseq
    %v17 = vand.u32 %v16, 127
    %18 = vset.pattern.permute.xlu0 0
    %19 = vperm.xlu0 %18, %v12
    %v20 = vpop.permute.xlu0 %19
    %21 = vset.pattern.permute.xlu0 0
    %22 = vperm.xlu0 %21, %v13
    %v23 = vpop.permute.xlu0 %22
    %vm24 = vcmp.eq.s32.totalorder %v17, %v20
    %vm25 = vcmp.eq.s32.totalorder %v17, %v23
    %v26 = vsel %vm24, 1, 0
    %v27 = vsel %vm25, 1, 0
    %v28 = vcvt.s32.f32 %v26
    %v29 = vcvt.s32.f32 %v27
    %32 = vrot.lane.b32.xlu0 %v14, 19
    %v33 = vpop.permute.xlu0 %32
    %34 = vrot.lane.b32.xlu0 %v15, 19
    %v35 = vpop.permute.xlu0 %34
    %vm38 = vcmask 162816
    %v39 = vsel %vm38, %v28, %v33
    %v40 = vsel %vm38, %v29, %v35
    %v41 = vld [vmem:[%s1] sm:$0xff]
    %v42 = vld [vmem:[%s1 + $0x8] sm:$0xff]
    %v43 = vld [vmem:[%s1 + $0x10] sm:$0x3f]
    %v44 = vld [vmem:[%s1 + $0x18] sm:$0x1]
    %v45 = vld [vmem:[%s1 + $0x20] sm:$0xff]
    %v46 = vld [vmem:[%s1 + $0x28] sm:$0x3]
    %v47 = vld [vmem:[%s1 + $0x30] sm:$0x1]
    %v48 = vld [vmem:[%s1 + $0x38] sm:$0xff]
    %v49 = vld [vmem:[%s1 + $0x40] sm:$0x3]
    %v50 = vld [vmem:[%s1 + $0x48] sm:$0x1]
    %v51 = vld [vmem:[%s1 + $0x50] sm:$0xff]
    %v52 = vld [vmem:[%s1 + $0x58] sm:$0x3]
    %v53 = vld [vmem:[%s1 + $0x60] sm:$0x1]
    %v54 = vperm.slane %v44, 0
    %vm55 = vcmask 179200
    %v57 = vsel %vm55, %v39, 0
    %v60 = vsel %vm55, %v40, 0
    %vm62 = vcmask 1045504
    %v64 = vsel %vm62, %v43, 0
    %66 = vmatpush.msra.mxu0 0.0
    %67 = vmatpush.msra.mxu0 0.0
    %68 = vmatpush.msra.mxu0 0.0
    %69 = vmatpush.msra.mxu0 0.0
    %70 = vmatpush.msra.mxu0 0.0
    %71 = vmatpush.msra.mxu0 0.0
    %72 = vmatpush.msra.mxu0 0.0
    %73 = vmatpush.msra.mxu0 0.0
    %74 = vmatpush.msra.mxu0 0.0
    %75 = vmatpush.msra.mxu0 0.0
    %76 = vmatpush.msra.mxu0 0.0
    %77 = vmatpush.msra.mxu0 0.0
    %78 = vmatpush.msra.mxu0 0.0
    %79 = vmatpush.msra.mxu0 %v64
    %80 = vmatpush.msra.mxu0 %v42
    %81 = vmatpush.msra.mxu0 %v41
    %82 = vmatmul.f32.gmra.mxu0 %v57
    %v83 = vpop.f32.mrf.mxu0
    %v84 = vadd.f32 %v54, %v83
    %85 = vmatmul.f32.gmra.mxu0 %v60
    %v86 = vpop.f32.mrf.mxu0
    %v87 = vadd.f32 %v54, %v86
    %88 = vdwg.mxu0
    %v89 = vmax.f32 %v84, 0.0
    %v90 = vmax.f32 %v87, 0.0
    %v91 = vperm.slane %v47, 0
    %vm92 = vcmask 80896
    %v94 = vsel %vm92, %v89, 0
    %v97 = vsel %vm92, %v90, 0
    %vm99 = vcmask 1041408
    %v101 = vsel %vm99, %v46, 0
    %103 = vmatpush.msra.mxu0 0.0
    %104 = vmatpush.msra.mxu0 0.0
    %105 = vmatpush.msra.mxu0 0.0
    %106 = vmatpush.msra.mxu0 0.0
    %107 = vmatpush.msra.mxu0 0.0
    %108 = vmatpush.msra.mxu0 0.0
    %109 = vmatpush.msra.mxu0 0.0
    %110 = vmatpush.msra.mxu0 0.0
    %111 = vmatpush.msra.mxu0 0.0
    %112 = vmatpush.msra.mxu0 0.0
    %113 = vmatpush.msra.mxu0 0.0
    %114 = vmatpush.msra.mxu0 0.0
    %115 = vmatpush.msra.mxu0 0.0
    %116 = vmatpush.msra.mxu0 0.0
    %117 = vmatpush.msra.mxu0 %v101
    %118 = vmatpush.msra.mxu0 %v45
    %119 = vmatmul.f32.gmra.mxu0 %v94
    %v120 = vpop.f32.mrf.mxu0
    %v121 = vadd.f32 %v91, %v120
    %122 = vmatmul.f32.gmra.mxu0 %v97
    %v123 = vpop.f32.mrf.mxu0
    %v124 = vadd.f32 %v91, %v123
    %125 = vdwg.mxu0
    %v126 = vmax.f32 %v121, 0.0
    %v127 = vmax.f32 %v124, 0.0
    %v128 = vsel %vm92, %v126, -inf
    %v129 = vrot.slane %v128, 4
    %v130 = vmax.f32 %v128, %v129
    %v131 = vrot.slane %v130, 2
    %v132 = vmax.f32 %v130, %v131
    %v133 = vrot.slane %v132, 1
    %v134 = vmax.f32 %v132, %v133
    %v135 = vsel %vm92, %v127, -inf
    %v136 = vrot.slane %v135, 4
    %v137 = vmax.f32 %v135, %v136
    %v138 = vrot.slane %v137, 2
    %v139 = vmax.f32 %v137, %v138
    %v140 = vrot.slane %v139, 1
    %v141 = vmax.f32 %v139, %v140
    %vm142 = vcmask 1040384
    %v143 = vsel %vm142, %v134, %v141
    %v144 = vperm.slane %v50, 0
    %v146 = vsel %vm92, %v143, 0
    %v149 = vsel %vm99, %v49, 0
    %151 = vmatpush.msra.mxu0 0.0
    %152 = vmatpush.msra.mxu0 0.0
    %153 = vmatpush.msra.mxu0 0.0
    %154 = vmatpush.msra.mxu0 0.0
    %155 = vmatpush.msra.mxu0 0.0
    %156 = vmatpush.msra.mxu0 0.0
    %157 = vmatpush.msra.mxu0 0.0
    %158 = vmatpush.msra.mxu0 0.0
    %159 = vmatpush.msra.mxu0 0.0
    %160 = vmatpush.msra.mxu0 0.0
    %161 = vmatpush.msra.mxu0 0.0
    %162 = vmatpush.msra.mxu0 0.0
    %163 = vmatpush.msra.mxu0 0.0
    %164 = vmatpush.msra.mxu0 0.0
    %165 = vmatpush.msra.mxu0 %v149
    %166 = vmatpush.msra.mxu0 %v48
    %167 = vmatmul.f32.gmra.mxu0 %v146
    %v168 = vpop.f32.mrf.mxu0
    %v169 = vadd.f32 %v144, %v168
    %170 = vdwg.mxu0
    %v171 = vmax.f32 %v169, 0.0
    %v172 = vperm.slane %v53, 0
    %v174 = vsel %vm92, %v171, 0
    %v177 = vsel %vm99, %v52, 0
    %179 = vmatpush.msra.mxu0 0.0
    %180 = vmatpush.msra.mxu0 0.0
    %181 = vmatpush.msra.mxu0 0.0
    %182 = vmatpush.msra.mxu0 0.0
    %183 = vmatpush.msra.mxu0 0.0
    %184 = vmatpush.msra.mxu0 0.0
    %185 = vmatpush.msra.mxu0 0.0
    %186 = vmatpush.msra.mxu0 0.0
    %187 = vmatpush.msra.mxu0 0.0
    %188 = vmatpush.msra.mxu0 0.0
    %189 = vmatpush.msra.mxu0 0.0
    %190 = vmatpush.msra.mxu0 0.0
    %191 = vmatpush.msra.mxu0 0.0
    %192 = vmatpush.msra.mxu0 0.0
    %193 = vmatpush.msra.mxu0 %v177
    %194 = vmatpush.msra.mxu0 %v51
    %195 = vmatmul.f32.gmra.mxu0 %v174
    %v196 = vpop.f32.mrf.mxu0
    %v197 = vadd.f32 %v172, %v196
    %198 = vdwg.mxu0
    %vm199 = vcmask 25600
    %200 = vst.msk [vmem:[#allocation2] sm:$0x3] %vm199, %v197
    // Predicated region
    $region10: #{forward.1} parent=1 // pred_check
      _
    $region11: #{forward.1} parent=1 // pred_check_branch
      %202 = sbr.rel (0) target = $region13
    $region12: #{forward.1} parent=1 // pred_region
      %204 = vsyncadd [#allocation3], 0
      %s206 = sshll.u32 [#allocation2], 4
      %s207 = int_to_ptr.vmem [resolvable:$true] %s206
      %s208 = sshll.u32 %s2, 4
      %s209 = int_to_ptr.hbm [resolvable:$true] %s208
      %211 = dma.vmem_to_hbm [thread:$0]  %s207, 32, %s209, [#allocation3]
    $region13: #{forward.1} parent=1 // pred_fallthru
      _
    // Predicated region
    $region14: #{forward.1} parent=1 // pred_check
      _
    $region15: #{forward.1} parent=1 // pred_check_branch
      %213 = sbr.rel (0) target = $region17
    $region16: #{forward.1} parent=1 // pred_region
      %215 = dma.done [#allocation3], 32
    $region17: #{forward.1} parent=1 // pred_fallthru
      _
    %216 = vsyncpa [#allocation3], 1

</llo_original>
